<compile_context>
chip_gen: v7x
topology: tpu7x:2x2x1
jax: 0.10.0
libtpu: 0.0.40
codegen_flags: <defaults>
</compile_context>

<pallas_src>
import functools

import jax
import jax.numpy as jnp
from jax.experimental import pallas as pl
from jax.experimental.pallas import tpu as pltpu


def _identity_copy_kernel(x_ref, o_ref):
    # Pure streaming copy of a lane-dense [tile_rows, cols] tile.
    o_ref[...] = x_ref[...]


def _compute_new_shape(shape, start_dim, end_dim):
    ndim = len(shape)
    start = start_dim if start_dim >= 0 else ndim + start_dim
    end = end_dim if end_dim >= 0 else ndim + end_dim
    shape_left = shape[:start]
    # initializer=1 so an empty flatten range does not raise.
    shape_middle = functools.reduce(lambda a, b: a * b, shape[start:end + 1], 1)
    shape_right = shape[end + 1:]
    return shape_left + (shape_middle,) + shape_right


def _choose_cols(total, max_cols=1024):
    """Largest multiple of 128 (<= max_cols) dividing the flat element count."""
    if total < 128 or total % 128 != 0:
        return None
    c = min(max_cols, total)
    c -= c % 128
    while c >= 128:
        if total % c == 0:
            return c
        c -= 128
    return None


def _choose_row_tile(rows, cols, itemsize, min_tiles=8):
    """Aligned row tile with per-buffer footprint <= ~3.5 MiB that divides `rows`.

    Prefers the largest tile that still yields >= min_tiles grid steps (so v7x's
    two TensorCores both get work); otherwise the smallest aligned divisor.
    """
    target_bytes = int(3.5 * 1024 * 1024)  # 4 buffers stay well under 16 MiB scoped VMEM
    row_bytes = max(1, cols * itemsize)
    max_rows = max(1, target_bytes // row_bytes)
    packing = max(1, 4 // itemsize)        # sublane packing for sub-32-bit dtypes
    align = 8 * packing

    start = min(rows, max_rows)
    start -= start % align
    candidates = [t for t in range(start, align - 1, -align) if rows % t == 0]

    if candidates:
        for t in candidates:               # descending: largest tile with enough steps
            if rows // t >= min_tiles:
                return t
        return candidates[-1]              # small row count: maximize grid steps instead

    # No aligned divisor: a single full-extent block is always legal if it fits VMEM.
    if rows <= max_rows:
        return rows
    return None


def flatten_pallas(x: jax.Array, start_dim: int = 1, end_dim: int = -1,
                   *, force_copy: bool = False) -> jax.Array:
    """Exact semantics of PyTorch Flatten.forward (flatten dims [start_dim, end_dim]).

    Default: zero-copy metadata reshape (fastest on every TPU generation).
    force_copy=True: materialize a fresh buffer via a lane-dense Pallas streaming copy.
    """
    shape = tuple(x.shape)
    new_shape = _compute_new_shape(shape, start_dim, end_dim)

    if not force_copy:
        # An identity copy can never beat not copying: reshape is metadata-only.
        return jnp.reshape(x, new_shape)

    total = 1
    for d in shape:
        total *= d
    if total == 0:
        return jnp.reshape(x, new_shape)

    itemsize = jnp.dtype(x.dtype).itemsize

    # Lane-dense 2-D factorization of the FLAT size (independent of new_shape[-1]).
    cols = _choose_cols(total)
    if cols is None:
        # No clean multiple-of-128 factorization: a copy would need masked stores;
        # fall back to the metadata reshape (what XLA does for free).
        # TODO(synk): optional padded-copy path for non-128-multiple flat sizes.
        return jnp.reshape(x, new_shape)
    rows = total // cols

    tile_rows = _choose_row_tile(rows, cols, itemsize)
    if tile_rows is None:
        return jnp.reshape(x, new_shape)

    x2d = jnp.reshape(x, (rows, cols))  # metadata-only

    grid = (rows // tile_rows,)
    out2d = pl.pallas_call(
        _identity_copy_kernel,
        out_shape=jax.ShapeDtypeStruct((rows, cols), x.dtype),
        grid=grid,
        in_specs=[pl.BlockSpec((tile_rows, cols), lambda i: (i, 0))],
        out_specs=pl.BlockSpec((tile_rows, cols), lambda i: (i, 0)),
        compiler_params=pltpu.CompilerParams(
            dimension_semantics=("parallel",),          # v7x: shard row tiles across both TCs
            vmem_limit_bytes=32 * 1024 * 1024,          # explicit headroom on all generations
        ),
        cost_estimate=pl.CostEstimate(
            flops=0, transcendentals=0, bytes_accessed=2 * total * itemsize),
    )(x2d)

    return jnp.reshape(out2d, new_shape)  # metadata-only


class Flatten:
    """Thin wrapper mirroring the nn.Module interface (zero-copy by default)."""

    def __init__(self, start_dim: int = 1, end_dim: int = -1) -> None:
        self.start_dim = start_dim
        self.end_dim = end_dim

    def __call__(self, x: jax.Array, *, force_copy: bool = False) -> jax.Array:
        return flatten_pallas(x, self.start_dim, self.end_dim, force_copy=force_copy)

    def extra_repr(self) -> str:
        return ", ".join(f"{k}={getattr(self, k)}" for k in ["start_dim", "end_dim"])


if __name__ == "__main__":
    key = jax.random.PRNGKey(0)
    # NCHW input, small shapes: batch=2, channels=4, spatial=16x16.
    x = jax.random.normal(key, (2, 4, 16, 16), dtype=jnp.float32)

    # Default Flatten (zero-copy path): (2, 4, 16, 16) -> (2, 1024)
    mod = Flatten()
    out = jax.block_until_ready(mod(x))
    ref = jnp.reshape(x, (2, 4 * 16 * 16))
    assert out.shape == ref.shape, (out.shape, ref.shape)
    assert out.dtype == ref.dtype, (out.dtype, ref.dtype)
    assert bool(jnp.all(out == ref)), "Flatten output mismatch (default, zero-copy)"

    # Forced-copy path exercises the Pallas kernel (single full-extent block here).
    out_k = jax.block_until_ready(mod(x, force_copy=True))
    assert bool(jnp.all(out_k == ref)), "Pallas Flatten output mismatch (forced copy)"

    # Negative start_dim + non-default dims (correctness fix): (2,4,16,16) -> (8,16,16)
    mod2 = Flatten(start_dim=-4, end_dim=1)
    out2 = jax.block_until_ready(mod2(x))
    ref2 = jnp.reshape(x, (8, 16, 16))
    assert out2.shape == ref2.shape, (out2.shape, ref2.shape)
    assert bool(jnp.all(out2 == ref2)), "Flatten output mismatch (start_dim=-4, end_dim=1)"
    out2_k = jax.block_until_ready(mod2(x, force_copy=True))
    assert bool(jnp.all(out2_k == ref2)), "Pallas Flatten mismatch (forced copy, neg start_dim)"

    # Slightly larger f32 input exercises the multi-tile grid (rows=32 -> 4 tiles of 8 rows).
    xl = jax.random.normal(key, (2, 4, 64, 64), dtype=jnp.float32)
    out_l = jax.block_until_ready(Flatten()(xl, force_copy=True))
    ref_l = jnp.reshape(xl, (2, 4 * 64 * 64))
    assert bool(jnp.all(out_l == ref_l)), "Pallas Flatten output mismatch (multi-tile f32)"

    # bf16 forced copy exercises the sublane-packing-aware alignment path.
    xb = x.astype(jnp.bfloat16)
    out_b = jax.block_until_ready(Flatten()(xb, force_copy=True))
    ref_b = jnp.reshape(xb, (2, 1024))
    assert bool(jnp.all(out_b == ref_b)), "Pallas Flatten output mismatch (bf16 forced copy)"

    print("KERNEL_OK")
</pallas_src>

<mosaic_0001>
module attributes {stable_mosaic.version = 11 : i64} {
  func.func @_identity_copy_kernel(%arg0: i32, %arg1: memref<2x1024xf32, #tpu.memory_space<vmem>>, %arg2: memref<2x1024xf32, #tpu.memory_space<vmem>>) attributes {dimension_semantics = [#tpu.dimension_semantics<parallel>], iteration_bounds = array<i64: 1>, scalar_prefetch = 0 : i64, scratch_operands = 0 : i64, tpu.core_type = #tpu.core_type<tc>, window_params = [{transform_indices = @transform_0, window_bounds = array<i64: 2, 1024>}, {transform_indices = @transform_1, window_bounds = array<i64: 2, 1024>}]} {
    %c0 = arith.constant 0 : index
    %c0_0 = arith.constant 0 : index
    %0 = vector.load %arg1[%c0, %c0_0] : memref<2x1024xf32, #tpu.memory_space<vmem>>, vector<2x1024xf32>
    %c0_1 = arith.constant 0 : index
    %c0_2 = arith.constant 0 : index
    %1 = vector.load %arg2[%c0_1, %c0_2] : memref<2x1024xf32, #tpu.memory_space<vmem>>, vector<2x1024xf32>
    tpu.vector_store %arg2[%c0_1, %c0_2], %0 {strides = array<i32>} : memref<2x1024xf32, #tpu.memory_space<vmem>>, vector<2x1024xf32>,
    return
  }
  func.func @transform_0(%arg0: i32) -> (i32, i32) {
    %c0_i32 = arith.constant 0 : i32
    %c0_i32_0 = arith.constant 0 : i32
    return %arg0, %c0_i32 : i32, i32
  }
  func.func @transform_1(%arg0: i32) -> (i32, i32) {
    %c0_i32 = arith.constant 0 : i32
    %c0_i32_0 = arith.constant 0 : i32
    return %arg0, %c0_i32 : i32, i32
  }
}

</mosaic_0001>

<llo_original>
// kernel: tpu_custom_call.1
$region0: #{tpu_custom_call.1}
  #allocation0 [shape = 'u32[]', space=smem, size = 0x4, offset = 0x4, fixed_abs, tag = 'smem constant byte address 0x4 - core index']
  #allocation1 [shape = 'u32[144,128]{1,0:T(1,128)}', space=vmem, size = 0x12000, scoped, tag = 'internal scratch']
  %s0 = inlined_call_operand.hbm [shape: f32[2,1024], index: 0, kind: input, shape index: {}]
  %s1 = inlined_call_operand.hbm [shape: f32[2,1024], index: 1, kind: output, shape index: {}]
  %s2 = sld [smem:[#allocation0]]
  $region18: #{tpu_custom_call.1} parent=0
    _
  %s4 = ssub.s32 1, %s2
  %s5 = scalar_select 0, %s4, %s2
  $region1: #{tpu_custom_call.1} parent=0
    #allocation2 [shape = 'u8[8192]{0}', space=vmem, size = 0x2000, scoped, tag = 'input window, operand 0, single buffered']
    #allocation3 [shape = 's32[1]{0}', space=sflag, size = 0x4, scoped, tag = 'scoped memory for tpu_custom_call.1']
    #allocation4 [shape = 's32[1]{0}', space=sflag, size = 0x4, scoped, tag = 'scoped memory for tpu_custom_call.1']
    #allocation5 [shape = 'u8[8192]{0}', space=vmem, size = 0x2000, scoped, tag = 'output window, operand 0, single buffered']
    %6 = vsyncpa [#allocation3], 0
    %7 = vsyncpa [#allocation4], 0
    // Predicated region
    $region2: #{tpu_custom_call.1} parent=1 // pred_check
      _
    $region3: #{tpu_custom_call.1} parent=1 // pred_check_branch
      %9 = sbr.rel (0) target = $region5
    $region4: #{tpu_custom_call.1} parent=1 // pred_region
      %s11 = ssub.s32 256, 256
      %12 = vsyncadd [#allocation3], %s11
      %s14 = sshll.u32 [#allocation2], 4
      %s15 = int_to_ptr.vmem [resolvable:$true] %s14
      %17 = dma.hbm_to_vmem [thread:$0]  %s0, 256, %s15, [#allocation3]
    $region5: #{tpu_custom_call.1} parent=1 // pred_fallthru
      _
    // Predicated region
    $region6: #{tpu_custom_call.1} parent=1 // pred_check
      _
    $region7: #{tpu_custom_call.1} parent=1 // pred_check_branch
      %19 = sbr.rel (0) target = $region9
    $region8: #{tpu_custom_call.1} parent=1 // pred_region
      %20 = dma.done [#allocation3], 256
    $region9: #{tpu_custom_call.1} parent=1 // pred_fallthru
      _
    %v21 = vld [vmem:[#allocation2] sm:$0xff]
    %v22 = vld [vmem:[#allocation2 + $0x8] sm:$0xff]
    %23 = vst [vmem:[#allocation5] sm:$0xff] %v21
    %24 = vst [vmem:[#allocation5 + $0x8] sm:$0xff] %v22
    // Predicated region
    $region10: #{tpu_custom_call.1} parent=1 // pred_check
      _
    $region11: #{tpu_custom_call.1} parent=1 // pred_check_branch
      %26 = sbr.rel (0) target = $region13
    $region12: #{tpu_custom_call.1} parent=1 // pred_region
      %s28 = ssub.s32 256, 256
      %29 = vsyncadd [#allocation4], %s28
      %s31 = sshll.u32 [#allocation5], 4
      %s32 = int_to_ptr.vmem [resolvable:$true] %s31
      %34 = dma.vmem_to_hbm [thread:$0]  %s32, 256, %s1, [#allocation4]
    $region13: #{tpu_custom_call.1} parent=1 // pred_fallthru
      _
    // Predicated region
    $region14: #{tpu_custom_call.1} parent=1 // pred_check
      _
    $region15: #{tpu_custom_call.1} parent=1 // pred_check_branch
      %36 = sbr.rel (0) target = $region17
    $region16: #{tpu_custom_call.1} parent=1 // pred_region
      %37 = dma.done [#allocation4], 256
    $region17: #{tpu_custom_call.1} parent=1 // pred_fallthru
      _
    %38 = vsyncpa [#allocation3], 1
    %39 = vsyncpa [#allocation4], 1

</llo_original>
